<compile_context>
chip_gen: v5e
topology: v5e:2x2
jax: 0.10.0
libtpu: 0.0.40
codegen_flags: <defaults>
</compile_context>

<pallas_src>
import jax
import jax.numpy as jnp
from jax.experimental import pallas as pl
from jax.experimental.pallas import tpu as pltpu


def rnn_kernel(x_ref, w_ih_ref, b_rnn_ref, w_hh_ref, w_fc_ref, b_fc_ref, out_ref):
    # x_ref: (T*B, D) time-major.  w_ih_ref: (D, H).  b_rnn_ref: (1, H).
    # w_hh_ref: (H, H).  w_fc_ref: (H, O).  b_fc_ref: (1, O).  out_ref: (B, O).
    TB, D = x_ref.shape
    H = w_hh_ref.shape[0]
    B = out_ref.shape[0]
    T = TB // B

    # --- Hoisted, h-independent work: one MXU matmul over all timesteps, with
    # the RNN bias folded in once. ----------------------------------------------
    xw = (
        jnp.dot(x_ref[...], w_ih_ref[...], preferred_element_type=jnp.float32)
        + b_rnn_ref[...]
    )                                                        # (T*B, H)

    w_hh = w_hh_ref[...]                                     # (H, H), resident

    # --- Serial recurrence: per step only a small (B,H)@(H,H) matmul, an add,
    # and a tanh sit on the critical path.  T is static and tiny -> fully
    # unrolled so the scheduler sees the whole dependency chain. ----------------
    h = jnp.zeros((B, H), dtype=jnp.float32)
    for t in range(T):
        xw_t = xw[t * B:(t + 1) * B, :]                      # static, sublane-aligned
        h = jnp.tanh(
            xw_t + jnp.dot(h, w_hh, preferred_element_type=jnp.float32)
        )                                                    # (B, H)

    # --- Fully-connected head, once, after the recurrence. ---------------------
    y = jnp.dot(h, w_fc_ref[...], preferred_element_type=jnp.float32) + b_fc_ref[...]
    out_ref[...] = y.astype(out_ref.dtype)


def simple_rnn_forward(x, w_ih, w_hh, b_ih, b_hh, w_fc, b_fc):
    """x: (B, T, D). Weights in PyTorch convention:
       w_ih (H, D), w_hh (H, H), b_ih (H,), b_hh (H,), w_fc (O, H), b_fc (O,)."""
    B, T, D = x.shape
    H = w_hh.shape[0]
    O = w_fc.shape[0]

    # Glue (all tiny, wrapper-side): time-major x so in-kernel per-step slices
    # are aligned row groups; transpose weights to (in, out); fold the two RNN
    # biases together.
    x_tm = jnp.transpose(x, (1, 0, 2)).reshape(T * B, D).astype(jnp.float32)  # (T*B, D)
    w_ih_t = jnp.transpose(w_ih).astype(jnp.float32)          # (D, H)
    w_hh_t = jnp.transpose(w_hh).astype(jnp.float32)          # (H, H)
    b_rnn = (b_ih + b_hh).reshape(1, H).astype(jnp.float32)   # (1, H)
    w_fc_t = jnp.transpose(w_fc).astype(jnp.float32)          # (H, O)
    b_fc2 = b_fc.reshape(1, O).astype(jnp.float32)            # (1, O)

    vmem = pl.BlockSpec(memory_space=pltpu.MemorySpace.VMEM)

    return pl.pallas_call(
        rnn_kernel,
        out_shape=jax.ShapeDtypeStruct((B, O), x.dtype),
        in_specs=[vmem, vmem, vmem, vmem, vmem, vmem],
        out_specs=vmem,
    )(x_tm, w_ih_t, b_rnn, w_hh_t, w_fc_t, b_fc2)


def reference_forward(x, w_ih, w_hh, b_ih, b_hh, w_fc, b_fc):
    """Plain-JAX reference mirroring PyTorch nn.RNN(batch_first=True) + Linear."""
    B, T, D = x.shape
    H = w_hh.shape[0]
    h = jnp.zeros((B, H), dtype=jnp.float32)
    for t in range(T):
        h = jnp.tanh(x[:, t, :] @ w_ih.T + b_ih + h @ w_hh.T + b_hh)
    return h @ w_fc.T + b_fc


if __name__ == "__main__":
    # Small shapes consistent with the module: batch=8, seq=8, input_dim=16,
    # hidden_dim=32, output_dim=8.
    B, T, D, H, O = 8, 8, 16, 32, 8

    key = jax.random.PRNGKey(0)
    k = jax.random.split(key, 7)
    s_rnn = 1.0 / jnp.sqrt(H)   # PyTorch nn.RNN init scale
    s_fc = 1.0 / jnp.sqrt(H)    # PyTorch nn.Linear init scale

    x = jax.random.normal(k[0], (B, T, D), dtype=jnp.float32)
    w_ih = jax.random.uniform(k[1], (H, D), minval=-s_rnn, maxval=s_rnn)
    w_hh = jax.random.uniform(k[2], (H, H), minval=-s_rnn, maxval=s_rnn)
    b_ih = jax.random.uniform(k[3], (H,), minval=-s_rnn, maxval=s_rnn)
    b_hh = jax.random.uniform(k[4], (H,), minval=-s_rnn, maxval=s_rnn)
    w_fc = jax.random.uniform(k[5], (O, H), minval=-s_fc, maxval=s_fc)
    b_fc = jax.random.uniform(k[6], (O,), minval=-s_fc, maxval=s_fc)

    out = simple_rnn_forward(x, w_ih, w_hh, b_ih, b_hh, w_fc, b_fc)
    out = jax.block_until_ready(out)

    ref = reference_forward(x, w_ih, w_hh, b_ih, b_hh, w_fc, b_fc)
    assert out.shape == (B, O)
    assert jnp.allclose(out, ref, atol=1e-5, rtol=1e-5), "mismatch vs reference"

    print("KERNEL_OK")
</pallas_src>

<mosaic_0001>
module attributes {stable_mosaic.version = 11 : i64} {
  func.func @rnn_kernel(%arg0: memref<64x16xf32, #tpu.memory_space<vmem>>, %arg1: memref<16x32xf32, #tpu.memory_space<vmem>>, %arg2: memref<1x32xf32, #tpu.memory_space<vmem>>, %arg3: memref<32x32xf32, #tpu.memory_space<vmem>>, %arg4: memref<32x8xf32, #tpu.memory_space<vmem>>, %arg5: memref<1x8xf32, #tpu.memory_space<vmem>>, %arg6: memref<8x8xf32, #tpu.memory_space<vmem>>) attributes {dimension_semantics = [], scalar_prefetch = 0 : i64, scratch_operands = 0 : i64, tpu.core_type = #tpu.core_type<tc>} {
    %c0 = arith.constant 0 : index
    %c0_0 = arith.constant 0 : index
    %0 = vector.load %arg0[%c0, %c0_0] : memref<64x16xf32, #tpu.memory_space<vmem>>, vector<64x16xf32>
    %c0_1 = arith.constant 0 : index
    %c0_2 = arith.constant 0 : index
    %1 = vector.load %arg1[%c0_1, %c0_2] : memref<16x32xf32, #tpu.memory_space<vmem>>, vector<16x32xf32>
    %cst = arith.constant dense<0.000000e+00> : vector<64x32xf32>
    %2 = tpu.matmul %0, %1, %cst {dimension_numbers = #tpu.dot_dimension_numbers<[1], [0], [0], [1], [0, 0, 1, 1], [], []>} : vector<64x16xf32>, vector<16x32xf32>, vector<64x32xf32> -> vector<64x32xf32>
    %c0_3 = arith.constant 0 : index
    %c0_4 = arith.constant 0 : index
    %3 = vector.load %arg2[%c0_3, %c0_4] : memref<1x32xf32, #tpu.memory_space<vmem>>, vector<1x32xf32>
    %4 = vector.broadcast %3 : vector<1x32xf32> to vector<64x32xf32>
    %5 = arith.addf %2, %4 : vector<64x32xf32>
    %c0_5 = arith.constant 0 : index
    %c0_6 = arith.constant 0 : index
    %6 = vector.load %arg3[%c0_5, %c0_6] : memref<32x32xf32, #tpu.memory_space<vmem>>, vector<32x32xf32>
    %cst_7 = arith.constant 0.000000e+00 : f32
    %7 = vector.broadcast %cst_7 : f32 to vector<8x32xf32>
    %8 = vector.extract_strided_slice %5 {offsets = [0, 0], sizes = [8, 32], strides = [1, 1]} : vector<64x32xf32> to vector<8x32xf32>
    %cst_8 = arith.constant dense<0.000000e+00> : vector<8x32xf32>
    %9 = tpu.matmul %7, %6, %cst_8 {dimension_numbers = #tpu.dot_dimension_numbers<[1], [0], [0], [1], [0, 0, 1, 1], [], []>} : vector<8x32xf32>, vector<32x32xf32>, vector<8x32xf32> -> vector<8x32xf32>
    %10 = arith.addf %8, %9 : vector<8x32xf32>
    %11 = math.tanh %10 : vector<8x32xf32>
    %12 = vector.extract_strided_slice %5 {offsets = [8, 0], sizes = [8, 32], strides = [1, 1]} : vector<64x32xf32> to vector<8x32xf32>
    %cst_9 = arith.constant dense<0.000000e+00> : vector<8x32xf32>
    %13 = tpu.matmul %11, %6, %cst_9 {dimension_numbers = #tpu.dot_dimension_numbers<[1], [0], [0], [1], [0, 0, 1, 1], [], []>} : vector<8x32xf32>, vector<32x32xf32>, vector<8x32xf32> -> vector<8x32xf32>
    %14 = arith.addf %12, %13 : vector<8x32xf32>
    %15 = math.tanh %14 : vector<8x32xf32>
    %16 = vector.extract_strided_slice %5 {offsets = [16, 0], sizes = [8, 32], strides = [1, 1]} : vector<64x32xf32> to vector<8x32xf32>
    %cst_10 = arith.constant dense<0.000000e+00> : vector<8x32xf32>
    %17 = tpu.matmul %15, %6, %cst_10 {dimension_numbers = #tpu.dot_dimension_numbers<[1], [0], [0], [1], [0, 0, 1, 1], [], []>} : vector<8x32xf32>, vector<32x32xf32>, vector<8x32xf32> -> vector<8x32xf32>
    %18 = arith.addf %16, %17 : vector<8x32xf32>
    %19 = math.tanh %18 : vector<8x32xf32>
    %20 = vector.extract_strided_slice %5 {offsets = [24, 0], sizes = [8, 32], strides = [1, 1]} : vector<64x32xf32> to vector<8x32xf32>
    %cst_11 = arith.constant dense<0.000000e+00> : vector<8x32xf32>
    %21 = tpu.matmul %19, %6, %cst_11 {dimension_numbers = #tpu.dot_dimension_numbers<[1], [0], [0], [1], [0, 0, 1, 1], [], []>} : vector<8x32xf32>, vector<32x32xf32>, vector<8x32xf32> -> vector<8x32xf32>
    %22 = arith.addf %20, %21 : vector<8x32xf32>
    %23 = math.tanh %22 : vector<8x32xf32>
    %24 = vector.extract_strided_slice %5 {offsets = [32, 0], sizes = [8, 32], strides = [1, 1]} : vector<64x32xf32> to vector<8x32xf32>
    %cst_12 = arith.constant dense<0.000000e+00> : vector<8x32xf32>
    %25 = tpu.matmul %23, %6, %cst_12 {dimension_numbers = #tpu.dot_dimension_numbers<[1], [0], [0], [1], [0, 0, 1, 1], [], []>} : vector<8x32xf32>, vector<32x32xf32>, vector<8x32xf32> -> vector<8x32xf32>
    %26 = arith.addf %24, %25 : vector<8x32xf32>
    %27 = math.tanh %26 : vector<8x32xf32>
    %28 = vector.extract_strided_slice %5 {offsets = [40, 0], sizes = [8, 32], strides = [1, 1]} : vector<64x32xf32> to vector<8x32xf32>
    %cst_13 = arith.constant dense<0.000000e+00> : vector<8x32xf32>
    %29 = tpu.matmul %27, %6, %cst_13 {dimension_numbers = #tpu.dot_dimension_numbers<[1], [0], [0], [1], [0, 0, 1, 1], [], []>} : vector<8x32xf32>, vector<32x32xf32>, vector<8x32xf32> -> vector<8x32xf32>
    %30 = arith.addf %28, %29 : vector<8x32xf32>
    %31 = math.tanh %30 : vector<8x32xf32>
    %32 = vector.extract_strided_slice %5 {offsets = [48, 0], sizes = [8, 32], strides = [1, 1]} : vector<64x32xf32> to vector<8x32xf32>
    %cst_14 = arith.constant dense<0.000000e+00> : vector<8x32xf32>
    %33 = tpu.matmul %31, %6, %cst_14 {dimension_numbers = #tpu.dot_dimension_numbers<[1], [0], [0], [1], [0, 0, 1, 1], [], []>} : vector<8x32xf32>, vector<32x32xf32>, vector<8x32xf32> -> vector<8x32xf32>
    %34 = arith.addf %32, %33 : vector<8x32xf32>
    %35 = math.tanh %34 : vector<8x32xf32>
    %36 = vector.extract_strided_slice %5 {offsets = [56, 0], sizes = [8, 32], strides = [1, 1]} : vector<64x32xf32> to vector<8x32xf32>
    %cst_15 = arith.constant dense<0.000000e+00> : vector<8x32xf32>
    %37 = tpu.matmul %35, %6, %cst_15 {dimension_numbers = #tpu.dot_dimension_numbers<[1], [0], [0], [1], [0, 0, 1, 1], [], []>} : vector<8x32xf32>, vector<32x32xf32>, vector<8x32xf32> -> vector<8x32xf32>
    %38 = arith.addf %36, %37 : vector<8x32xf32>
    %39 = math.tanh %38 : vector<8x32xf32>
    %c0_16 = arith.constant 0 : index
    %c0_17 = arith.constant 0 : index
    %40 = vector.load %arg4[%c0_16, %c0_17] : memref<32x8xf32, #tpu.memory_space<vmem>>, vector<32x8xf32>
    %cst_18 = arith.constant dense<0.000000e+00> : vector<8x8xf32>
    %41 = tpu.matmul %39, %40, %cst_18 {dimension_numbers = #tpu.dot_dimension_numbers<[1], [0], [0], [1], [0, 0, 1, 1], [], []>} : vector<8x32xf32>, vector<32x8xf32>, vector<8x8xf32> -> vector<8x8xf32>
    %c0_19 = arith.constant 0 : index
    %c0_20 = arith.constant 0 : index
    %42 = vector.load %arg5[%c0_19, %c0_20] : memref<1x8xf32, #tpu.memory_space<vmem>>, vector<1x8xf32>
    %43 = vector.broadcast %42 : vector<1x8xf32> to vector<8x8xf32>
    %44 = arith.addf %41, %43 : vector<8x8xf32>
    %c0_21 = arith.constant 0 : index
    %c0_22 = arith.constant 0 : index
    %45 = vector.load %arg6[%c0_21, %c0_22] : memref<8x8xf32, #tpu.memory_space<vmem>>, vector<8x8xf32>
    tpu.vector_store %arg6[%c0_21, %c0_22], %44 {strides = array<i32>} : memref<8x8xf32, #tpu.memory_space<vmem>>, vector<8x8xf32>,
    return
  }
}

</mosaic_0001>

<llo_original>
// kernel: tpu_custom_call.1
$region0: #{tpu_custom_call.1}
  #allocation0 [shape = 'u32[]', space=smem, size = 0x4, offset = 0x4, fixed_abs, tag = 'smem constant byte address 0x4 - core index']
  #allocation1 [shape = 'u32[72,128]{1,0:T(1,128)}', space=vmem, size = 0x9000, scoped, tag = 'internal scratch']
  %s0 = inlined_call_operand.vmem [shape: f32[64,16], index: 0, kind: input, shape index: {}]
  %s1 = inlined_call_operand.vmem [shape: f32[16,32], index: 1, kind: input, shape index: {}]
  %s2 = inlined_call_operand.vmem [shape: f32[1,32], index: 2, kind: input, shape index: {}]
  %s3 = inlined_call_operand.vmem [shape: f32[32,32], index: 3, kind: input, shape index: {}]
  %s4 = inlined_call_operand.vmem [shape: f32[32,8], index: 4, kind: input, shape index: {}]
  %s5 = inlined_call_operand.vmem [shape: f32[1,8], index: 5, kind: input, shape index: {}]
  %s6 = inlined_call_operand.hbm [shape: f32[8,8], index: 6, kind: output, shape index: {}]
  %s7 = sld [smem:[#allocation0]]
  $region34: #{tpu_custom_call.1} parent=0
    _
  %s9 = ssub.s32 1, %s7
  %s10 = scalar_select 0, %s9, %s7
  $region1: #{tpu_custom_call.1} parent=0
    #allocation2 [shape = 'u8[4096]{0}', space=vmem, size = 0x1000, scoped, tag = 'output window, operand 0, single buffered']
    #allocation3 [shape = 's32[1]{0}', space=sflag, size = 0x4, scoped, tag = 'scoped memory for tpu_custom_call.1']
    %11 = vsyncpa [#allocation3], 0
    // Predicated region
    $region2: #{tpu_custom_call.1} parent=1 // pred_check
      _
    $region3: #{tpu_custom_call.1} parent=1 // pred_check_branch
      %13 = sbr.rel (0) target = $region5
    $region4: #{tpu_custom_call.1} parent=1 // pred_region
      _
    $region5: #{tpu_custom_call.1} parent=1 // pred_fallthru
      _
    // Predicated region
    $region6: #{tpu_custom_call.1} parent=1 // pred_check
      _
    $region7: #{tpu_custom_call.1} parent=1 // pred_check_branch
      %15 = sbr.rel (0) target = $region9
    $region8: #{tpu_custom_call.1} parent=1 // pred_region
      _
    $region9: #{tpu_custom_call.1} parent=1 // pred_fallthru
      _
    // Predicated region
    $region10: #{tpu_custom_call.1} parent=1 // pred_check
      _
    $region11: #{tpu_custom_call.1} parent=1 // pred_check_branch
      %17 = sbr.rel (0) target = $region13
    $region12: #{tpu_custom_call.1} parent=1 // pred_region
      _
    $region13: #{tpu_custom_call.1} parent=1 // pred_fallthru
      _
    // Predicated region
    $region14: #{tpu_custom_call.1} parent=1 // pred_check
      _
    $region15: #{tpu_custom_call.1} parent=1 // pred_check_branch
      %19 = sbr.rel (0) target = $region17
    $region16: #{tpu_custom_call.1} parent=1 // pred_region
      _
    $region17: #{tpu_custom_call.1} parent=1 // pred_fallthru
      _
    // Predicated region
    $region18: #{tpu_custom_call.1} parent=1 // pred_check
      _
    $region19: #{tpu_custom_call.1} parent=1 // pred_check_branch
      %21 = sbr.rel (0) target = $region21
    $region20: #{tpu_custom_call.1} parent=1 // pred_region
      _
    $region21: #{tpu_custom_call.1} parent=1 // pred_fallthru
      _
    // Predicated region
    $region22: #{tpu_custom_call.1} parent=1 // pred_check
      _
    $region23: #{tpu_custom_call.1} parent=1 // pred_check_branch
      %23 = sbr.rel (0) target = $region25
    $region24: #{tpu_custom_call.1} parent=1 // pred_region
      _
    $region25: #{tpu_custom_call.1} parent=1 // pred_fallthru
      _
    %v24 = vld [vmem:[%s0] sm:$0xff]
    %v25 = vld [vmem:[%s0 + $0x8] sm:$0xff]
    %v26 = vld [vmem:[%s0 + $0x10] sm:$0xff]
    %v27 = vld [vmem:[%s0 + $0x18] sm:$0xff]
    %v28 = vld [vmem:[%s0 + $0x20] sm:$0xff]
    %v29 = vld [vmem:[%s0 + $0x28] sm:$0xff]
    %v30 = vld [vmem:[%s0 + $0x30] sm:$0xff]
    %v31 = vld [vmem:[%s0 + $0x38] sm:$0xff]
    %v32 = vld [vmem:[%s1] sm:$0xff]
    %v33 = vld [vmem:[%s1 + $0x8] sm:$0xff]
    %v34 = vld [vmem:[%s2] sm:$0x1]
    %v36 = vperm.slane %v34, 0
    %vm38 = vcmask 130048
    %v40 = vsel %vm38, %v24, 0
    %v43 = vsel %vm38, %v25, 0
    %v46 = vsel %vm38, %v26, 0
    %v49 = vsel %vm38, %v27, 0
    %v52 = vsel %vm38, %v28, 0
    %v55 = vsel %vm38, %v29, 0
    %v58 = vsel %vm38, %v30, 0
    %v61 = vsel %vm38, %v31, 0
    %63 = vmatpush.msra.mxu0 0.0
    %64 = vmatpush.msra.mxu0 0.0
    %65 = vmatpush.msra.mxu0 0.0
    %66 = vmatpush.msra.mxu0 0.0
    %67 = vmatpush.msra.mxu0 0.0
    %68 = vmatpush.msra.mxu0 0.0
    %69 = vmatpush.msra.mxu0 0.0
    %70 = vmatpush.msra.mxu0 0.0
    %71 = vmatpush.msra.mxu0 0.0
    %72 = vmatpush.msra.mxu0 0.0
    %73 = vmatpush.msra.mxu0 0.0
    %74 = vmatpush.msra.mxu0 0.0
    %75 = vmatpush.msra.mxu0 0.0
    %76 = vmatpush.msra.mxu0 0.0
    %77 = vmatpush.msra.mxu0 %v33
    %78 = vmatpush.msra.mxu0 %v32
    %79 = vmatmul.f32.gmra.mxu0 %v40
    %v80 = vpop.f32.mrf.mxu0
    %v81 = vadd.f32 %v36, %v80
    %82 = vmatmul.f32.gmra.mxu0 %v43
    %v83 = vpop.f32.mrf.mxu0
    %v84 = vadd.f32 %v36, %v83
    %85 = vmatmul.f32.gmra.mxu0 %v46
    %v86 = vpop.f32.mrf.mxu0
    %v87 = vadd.f32 %v36, %v86
    %88 = vmatmul.f32.gmra.mxu0 %v49
    %v89 = vpop.f32.mrf.mxu0
    %v90 = vadd.f32 %v36, %v89
    %91 = vmatmul.f32.gmra.mxu0 %v52
    %v92 = vpop.f32.mrf.mxu0
    %v93 = vadd.f32 %v36, %v92
    %94 = vmatmul.f32.gmra.mxu0 %v55
    %v95 = vpop.f32.mrf.mxu0
    %v96 = vadd.f32 %v36, %v95
    %97 = vmatmul.f32.gmra.mxu0 %v58
    %v98 = vpop.f32.mrf.mxu0
    %v99 = vadd.f32 %v36, %v98
    %100 = vmatmul.f32.gmra.mxu0 %v61
    %v101 = vpop.f32.mrf.mxu0
    %v102 = vadd.f32 %v36, %v101
    %103 = vdwg.mxu0
    %v104 = vld [vmem:[%s3] sm:$0xff]
    %v105 = vld [vmem:[%s3 + $0x8] sm:$0xff]
    %v106 = vld [vmem:[%s3 + $0x10] sm:$0xff]
    %v107 = vld [vmem:[%s3 + $0x18] sm:$0xff]
    %vm108 = vcmask 261120
    %v110 = vsel %vm108, 0.0, 0
    %112 = vmatpush.msra.mxu0 0.0
    %113 = vmatpush.msra.mxu0 0.0
    %114 = vmatpush.msra.mxu0 0.0
    %115 = vmatpush.msra.mxu0 0.0
    %116 = vmatpush.msra.mxu0 0.0
    %117 = vmatpush.msra.mxu0 0.0
    %118 = vmatpush.msra.mxu0 0.0
    %119 = vmatpush.msra.mxu0 0.0
    %120 = vmatpush.msra.mxu0 0.0
    %121 = vmatpush.msra.mxu0 0.0
    %122 = vmatpush.msra.mxu0 0.0
    %123 = vmatpush.msra.mxu0 0.0
    %124 = vmatpush.msra.mxu0 %v107
    %125 = vmatpush.msra.mxu0 %v106
    %126 = vmatpush.msra.mxu0 %v105
    %127 = vmatpush.msra.mxu0 %v104
    %128 = vmatmul.f32.gmra.mxu0 %v110
    %v129 = vpop.f32.mrf.mxu0
    %v130 = vadd.f32 0.0, %v129
    %131 = vdwg.mxu0
    %v132 = vadd.f32 %v81, %v130
    %v133 = vtanh.pop %v132
    %v135 = vsel %vm108, %v133, 0
    %137 = vmatpush.msra.mxu0 0.0
    %138 = vmatpush.msra.mxu0 0.0
    %139 = vmatpush.msra.mxu0 0.0
    %140 = vmatpush.msra.mxu0 0.0
    %141 = vmatpush.msra.mxu0 0.0
    %142 = vmatpush.msra.mxu0 0.0
    %143 = vmatpush.msra.mxu0 0.0
    %144 = vmatpush.msra.mxu0 0.0
    %145 = vmatpush.msra.mxu0 0.0
    %146 = vmatpush.msra.mxu0 0.0
    %147 = vmatpush.msra.mxu0 0.0
    %148 = vmatpush.msra.mxu0 0.0
    %149 = vmatpush.msra.mxu0 %v107
    %150 = vmatpush.msra.mxu0 %v106
    %151 = vmatpush.msra.mxu0 %v105
    %152 = vmatpush.msra.mxu0 %v104
    %153 = vmatmul.f32.gmra.mxu0 %v135
    %v154 = vpop.f32.mrf.mxu0
    %v155 = vadd.f32 0.0, %v154
    %156 = vdwg.mxu0
    %v157 = vadd.f32 %v84, %v155
    %v158 = vtanh.pop %v157
    %v160 = vsel %vm108, %v158, 0
    %162 = vmatpush.msra.mxu0 0.0
    %163 = vmatpush.msra.mxu0 0.0
    %164 = vmatpush.msra.mxu0 0.0
    %165 = vmatpush.msra.mxu0 0.0
    %166 = vmatpush.msra.mxu0 0.0
    %167 = vmatpush.msra.mxu0 0.0
    %168 = vmatpush.msra.mxu0 0.0
    %169 = vmatpush.msra.mxu0 0.0
    %170 = vmatpush.msra.mxu0 0.0
    %171 = vmatpush.msra.mxu0 0.0
    %172 = vmatpush.msra.mxu0 0.0
    %173 = vmatpush.msra.mxu0 0.0
    %174 = vmatpush.msra.mxu0 %v107
    %175 = vmatpush.msra.mxu0 %v106
    %176 = vmatpush.msra.mxu0 %v105
    %177 = vmatpush.msra.mxu0 %v104
    %178 = vmatmul.f32.gmra.mxu0 %v160
    %v179 = vpop.f32.mrf.mxu0
    %v180 = vadd.f32 0.0, %v179
    %181 = vdwg.mxu0
    %v182 = vadd.f32 %v87, %v180
    %v183 = vtanh.pop %v182
    %v185 = vsel %vm108, %v183, 0
    %187 = vmatpush.msra.mxu0 0.0
    %188 = vmatpush.msra.mxu0 0.0
    %189 = vmatpush.msra.mxu0 0.0
    %190 = vmatpush.msra.mxu0 0.0
    %191 = vmatpush.msra.mxu0 0.0
    %192 = vmatpush.msra.mxu0 0.0
    %193 = vmatpush.msra.mxu0 0.0
    %194 = vmatpush.msra.mxu0 0.0
    %195 = vmatpush.msra.mxu0 0.0
    %196 = vmatpush.msra.mxu0 0.0
    %197 = vmatpush.msra.mxu0 0.0
    %198 = vmatpush.msra.mxu0 0.0
    %199 = vmatpush.msra.mxu0 %v107
    %200 = vmatpush.msra.mxu0 %v106
    %201 = vmatpush.msra.mxu0 %v105
    %202 = vmatpush.msra.mxu0 %v104
    %203 = vmatmul.f32.gmra.mxu0 %v185
    %v204 = vpop.f32.mrf.mxu0
    %v205 = vadd.f32 0.0, %v204
    %206 = vdwg.mxu0
    %v207 = vadd.f32 %v90, %v205
    %v208 = vtanh.pop %v207
    %v210 = vsel %vm108, %v208, 0
    %212 = vmatpush.msra.mxu0 0.0
    %213 = vmatpush.msra.mxu0 0.0
    %214 = vmatpush.msra.mxu0 0.0
    %215 = vmatpush.msra.mxu0 0.0
    %216 = vmatpush.msra.mxu0 0.0
    %217 = vmatpush.msra.mxu0 0.0
    %218 = vmatpush.msra.mxu0 0.0
    %219 = vmatpush.msra.mxu0 0.0
    %220 = vmatpush.msra.mxu0 0.0
    %221 = vmatpush.msra.mxu0 0.0
    %222 = vmatpush.msra.mxu0 0.0
    %223 = vmatpush.msra.mxu0 0.0
    %224 = vmatpush.msra.mxu0 %v107
    %225 = vmatpush.msra.mxu0 %v106
    %226 = vmatpush.msra.mxu0 %v105
    %227 = vmatpush.msra.mxu0 %v104
    %228 = vmatmul.f32.gmra.mxu0 %v210
    %v229 = vpop.f32.mrf.mxu0
    %v230 = vadd.f32 0.0, %v229
    %231 = vdwg.mxu0
    %v232 = vadd.f32 %v93, %v230
    %v233 = vtanh.pop %v232
    %v235 = vsel %vm108, %v233, 0
    %237 = vmatpush.msra.mxu0 0.0
    %238 = vmatpush.msra.mxu0 0.0
    %239 = vmatpush.msra.mxu0 0.0
    %240 = vmatpush.msra.mxu0 0.0
    %241 = vmatpush.msra.mxu0 0.0
    %242 = vmatpush.msra.mxu0 0.0
    %243 = vmatpush.msra.mxu0 0.0
    %244 = vmatpush.msra.mxu0 0.0
    %245 = vmatpush.msra.mxu0 0.0
    %246 = vmatpush.msra.mxu0 0.0
    %247 = vmatpush.msra.mxu0 0.0
    %248 = vmatpush.msra.mxu0 0.0
    %249 = vmatpush.msra.mxu0 %v107
    %250 = vmatpush.msra.mxu0 %v106
    %251 = vmatpush.msra.mxu0 %v105
    %252 = vmatpush.msra.mxu0 %v104
    %253 = vmatmul.f32.gmra.mxu0 %v235
    %v254 = vpop.f32.mrf.mxu0
    %v255 = vadd.f32 0.0, %v254
    %256 = vdwg.mxu0
    %v257 = vadd.f32 %v96, %v255
    %v258 = vtanh.pop %v257
    %v260 = vsel %vm108, %v258, 0
    %262 = vmatpush.msra.mxu0 0.0
    %263 = vmatpush.msra.mxu0 0.0
    %264 = vmatpush.msra.mxu0 0.0
    %265 = vmatpush.msra.mxu0 0.0
    %266 = vmatpush.msra.mxu0 0.0
    %267 = vmatpush.msra.mxu0 0.0
    %268 = vmatpush.msra.mxu0 0.0
    %269 = vmatpush.msra.mxu0 0.0
    %270 = vmatpush.msra.mxu0 0.0
    %271 = vmatpush.msra.mxu0 0.0
    %272 = vmatpush.msra.mxu0 0.0
    %273 = vmatpush.msra.mxu0 0.0
    %274 = vmatpush.msra.mxu0 %v107
    %275 = vmatpush.msra.mxu0 %v106
    %276 = vmatpush.msra.mxu0 %v105
    %277 = vmatpush.msra.mxu0 %v104
    %278 = vmatmul.f32.gmra.mxu0 %v260
    %v279 = vpop.f32.mrf.mxu0
    %v280 = vadd.f32 0.0, %v279
    %281 = vdwg.mxu0
    %v282 = vadd.f32 %v99, %v280
    %v283 = vtanh.pop %v282
    %v285 = vsel %vm108, %v283, 0
    %287 = vmatpush.msra.mxu0 0.0
    %288 = vmatpush.msra.mxu0 0.0
    %289 = vmatpush.msra.mxu0 0.0
    %290 = vmatpush.msra.mxu0 0.0
    %291 = vmatpush.msra.mxu0 0.0
    %292 = vmatpush.msra.mxu0 0.0
    %293 = vmatpush.msra.mxu0 0.0
    %294 = vmatpush.msra.mxu0 0.0
    %295 = vmatpush.msra.mxu0 0.0
    %296 = vmatpush.msra.mxu0 0.0
    %297 = vmatpush.msra.mxu0 0.0
    %298 = vmatpush.msra.mxu0 0.0
    %299 = vmatpush.msra.mxu0 %v107
    %300 = vmatpush.msra.mxu0 %v106
    %301 = vmatpush.msra.mxu0 %v105
    %302 = vmatpush.msra.mxu0 %v104
    %303 = vmatmul.f32.gmra.mxu0 %v285
    %v304 = vpop.f32.mrf.mxu0
    %v305 = vadd.f32 0.0, %v304
    %306 = vdwg.mxu0
    %v307 = vadd.f32 %v102, %v305
    %v308 = vtanh.pop %v307
    %v309 = vld [vmem:[%s4] sm:$0xff]
    %v310 = vld [vmem:[%s4 + $0x8] sm:$0xff]
    %v311 = vld [vmem:[%s4 + $0x10] sm:$0xff]
    %v312 = vld [vmem:[%s4 + $0x18] sm:$0xff]
    %v313 = vld [vmem:[%s5] sm:$0x1]
    %v315 = vperm.slane %v313, 0
    %v318 = vsel %vm108, %v308, 0
    %320 = vmatpush.msra.mxu0 0.0
    %321 = vmatpush.msra.mxu0 0.0
    %322 = vmatpush.msra.mxu0 0.0
    %323 = vmatpush.msra.mxu0 0.0
    %324 = vmatpush.msra.mxu0 0.0
    %325 = vmatpush.msra.mxu0 0.0
    %326 = vmatpush.msra.mxu0 0.0
    %327 = vmatpush.msra.mxu0 0.0
    %328 = vmatpush.msra.mxu0 0.0
    %329 = vmatpush.msra.mxu0 0.0
    %330 = vmatpush.msra.mxu0 0.0
    %331 = vmatpush.msra.mxu0 0.0
    %332 = vmatpush.msra.mxu0 %v312
    %333 = vmatpush.msra.mxu0 %v311
    %334 = vmatpush.msra.mxu0 %v310
    %335 = vmatpush.msra.mxu0 %v309
    %336 = vmatmul.f32.gmra.mxu0 %v318
    %v337 = vpop.f32.mrf.mxu0
    %v338 = vadd.f32 %v315, %v337
    %339 = vdwg.mxu0
    %vm340 = vcmask 64512
    %341 = vst.msk [vmem:[#allocation2] sm:$0xff] %vm340, %v338
    // Predicated region
    $region26: #{tpu_custom_call.1} parent=1 // pred_check
      _
    $region27: #{tpu_custom_call.1} parent=1 // pred_check_branch
      %343 = sbr.rel (0) target = $region29
    $region28: #{tpu_custom_call.1} parent=1 // pred_region
      %345 = vsyncadd [#allocation3], 0
      %s347 = sshll.u32 [#allocation2], 4
      %s348 = int_to_ptr.vmem [resolvable:$true] %s347
      %s349 = sshll.u32 %s6, 4
      %s350 = int_to_ptr.hbm [resolvable:$true] %s349
      %352 = dma.vmem_to_hbm [thread:$0]  %s348, 128, %s350, [#allocation3]
    $region29: #{tpu_custom_call.1} parent=1 // pred_fallthru
      _
    // Predicated region
    $region30: #{tpu_custom_call.1} parent=1 // pred_check
      _
    $region31: #{tpu_custom_call.1} parent=1 // pred_check_branch
      %354 = sbr.rel (0) target = $region33
    $region32: #{tpu_custom_call.1} parent=1 // pred_region
      %356 = dma.done [#allocation3], 128
    $region33: #{tpu_custom_call.1} parent=1 // pred_fallthru
      _
    %357 = vsyncpa [#allocation3], 1

</llo_original>
